<compile_context>
chip_gen: v5e
topology: v5e:2x2
jax: 0.10.0
libtpu: 0.0.40
codegen_flags: <defaults>
</compile_context>

<pallas_src>
import functools

import jax
import jax.numpy as jnp
from jax import lax
from jax.experimental import pallas as pl
from jax.experimental.pallas import tpu as pltpu


def _round_up(x: int, m: int) -> int:
    return ((x + m - 1) // m) * m


def _f1_counts_kernel(preds_ref, trues_ref, counts_ref, *,
                      c_pad: int, tile_n: int, n_samples: int,
                      has_tail: bool):
    """Accumulates per-class (tp, true_count, pred_count) into counts_ref.

    preds_ref / trues_ref : (1, tile_n) int    (lanes past n_samples on the
                            last tile hold garbage -> masked in-kernel)
    counts_ref            : (c_pad, 3) int32   resident accumulator per split
    """
    split = pl.program_id(0)
    step = pl.program_id(1)
    steps = pl.num_programs(1)

    @pl.when(step == 0)
    def _init():
        counts_ref[...] = jnp.zeros_like(counts_ref)

    # Classes on sublanes; lane broadcast against (1, tile_n) inputs is free.
    class_ids = lax.broadcasted_iota(jnp.int32, (c_pad, 1), 0)

    def accum(apply_mask):
        preds = preds_ref[...].astype(jnp.int32)            # (1, T)
        trues = trues_ref[...].astype(jnp.int32)            # (1, T)
        pred_oh = preds == class_ids                         # (c_pad, T) bool
        true_oh = trues == class_ids                         # (c_pad, T) bool
        if apply_mask:
            tile_start = (split * steps + step) * tile_n
            lane = lax.broadcasted_iota(jnp.int32, (1, tile_n), 1)
            valid = (tile_start + lane) < n_samples          # (1, T) bool
            pred_oh = jnp.logical_and(pred_oh, valid)
            true_oh = jnp.logical_and(true_oh, valid)
        pred_i = pred_oh.astype(jnp.int32)                   # convert once
        true_i = true_oh.astype(jnp.int32)                   # convert once
        tp = jnp.sum(pred_i * true_i, axis=1, keepdims=True)     # (c_pad, 1)
        tcnt = jnp.sum(true_i, axis=1, keepdims=True)             # (c_pad, 1)
        pcnt = jnp.sum(pred_i, axis=1, keepdims=True)             # (c_pad, 1)
        # Single coalesced read-modify-write of the tiny accumulator.
        counts_ref[...] += jnp.concatenate([tp, tcnt, pcnt], axis=1)

    if has_tail:
        tile_start = (split * steps + step) * tile_n
        is_full = tile_start + tile_n <= n_samples

        @pl.when(is_full)
        def _full_tile():
            accum(False)

        @pl.when(jnp.logical_not(is_full))
        def _ragged_tile():
            accum(True)
    else:
        accum(False)


def f1_score(preds: jax.Array, trues: jax.Array, num_classes: int,
             eps: float = 1e-7, *, tile_n: int = 65536,
             num_splits: int = 2) -> jax.Array:
    """preds, trues: int arrays of shape (N,) with values in [0, num_classes)."""
    N = int(preds.shape[0])
    c_pad = max(8, _round_up(num_classes, 8))

    # --- tiling: tile_n multiple of 128, grid = (num_splits, steps) ----------
    tile_n = max(128, _round_up(min(int(tile_n), _round_up(N, 128)), 128))
    n_tiles = -(-N // tile_n)                                   # cdiv
    num_splits = max(1, min(int(num_splits), n_tiles))
    steps = -(-n_tiles // num_splits)                           # cdiv
    # Ragged last tile and/or phantom grid steps past the data?
    has_tail = (num_splits * steps * tile_n) != N
    last_block = n_tiles - 1

    # Free metadata reshapes only: no wrapper-side cast / pad HBM passes.
    preds2 = preds.reshape(1, N)
    trues2 = trues.reshape(1, N)

    def in_map(p, s):
        # Clamp so phantom steps past the data re-read the last real block;
        # their contribution is fully masked out in-kernel.
        return (0, jnp.minimum(p * steps + s, last_block))

    kernel = functools.partial(_f1_counts_kernel, c_pad=c_pad, tile_n=tile_n,
                               n_samples=N, has_tail=has_tail)
    counts = pl.pallas_call(
        kernel,
        out_shape=jax.ShapeDtypeStruct((num_splits, c_pad, 3), jnp.int32),
        grid=(num_splits, steps),
        in_specs=[
            pl.BlockSpec((1, tile_n), in_map),
            pl.BlockSpec((1, tile_n), in_map),
        ],
        # Same block across the "arbitrary" axis -> resident int32 accumulator.
        out_specs=pl.BlockSpec((None, c_pad, 3), lambda p, s: (p, 0, 0)),
        compiler_params=pltpu.CompilerParams(
            dimension_semantics=("parallel", "arbitrary"),
            vmem_limit_bytes=32 * 1024 * 1024),
    )(preds2, trues2)

    # --- tiny O(num_classes) epilogue in plain JAX ----------------------------
    # Sum splits in int32 (exact for any realistic N), cast to f32 only for
    # the ratio math.
    counts = counts.sum(axis=0)[:num_classes].astype(jnp.float32)   # (C, 3)
    tp = counts[:, 0]
    true_cnt = counts[:, 1]   # confusion-matrix row sums  (# samples with true label c)
    pred_cnt = counts[:, 2]   # confusion-matrix column sums (# samples predicted as c)
    false_negatives = true_cnt - tp
    false_positives = pred_cnt - tp
    # Exactly mirrors the PyTorch module (incl. its precision/recall swap).
    precision = tp / (tp + false_negatives + eps)
    recall = tp / (tp + false_positives + eps)
    f1 = 2.0 * precision * recall / (precision + recall + eps)
    return jnp.mean(f1)


def _f1_score_ref(preds, trues, num_classes, eps=1e-7):
    """Pure-JAX reference mirroring the PyTorch module."""
    cm = jnp.zeros((num_classes, num_classes), jnp.float32)
    cm = cm.at[trues, preds].add(1.0)
    tp = jnp.diag(cm)
    fp = jnp.sum(cm, axis=0) - tp
    fn = jnp.sum(cm, axis=1) - tp
    precision = tp / (tp + fn + eps)
    recall = tp / (tp + fp + eps)
    f1 = 2 * precision * recall / (precision + recall + eps)
    return jnp.mean(f1)


if __name__ == "__main__":
    key = jax.random.PRNGKey(0)

    # Case 1: small, single tile / single split, ragged tail (1000 % 128 != 0).
    NUM_CLASSES = 8
    N = 1000
    kp, kt, key = jax.random.split(key, 3)
    preds = jax.random.randint(kp, (N,), 0, NUM_CLASSES, dtype=jnp.int32)
    trues = jax.random.randint(kt, (N,), 0, NUM_CLASSES, dtype=jnp.int32)
    out = jax.block_until_ready(f1_score(preds, trues, NUM_CLASSES))
    ref = _f1_score_ref(preds, trues, NUM_CLASSES)
    assert jnp.allclose(out, ref, atol=1e-5, rtol=1e-5), (out, ref)

    # Case 2: multiple grid steps, both splits, class padding (5 -> 8),
    # ragged last tile AND a phantom (fully-masked, clamped) grid step:
    # N=4500, tile_n=512 -> 9 real tiles over a (2, 5) grid.
    NUM_CLASSES2 = 5
    N2 = 4500
    kp2, kt2, key = jax.random.split(key, 3)
    preds2 = jax.random.randint(kp2, (N2,), 0, NUM_CLASSES2, dtype=jnp.int32)
    trues2 = jax.random.randint(kt2, (N2,), 0, NUM_CLASSES2, dtype=jnp.int32)
    out2 = jax.block_until_ready(
        f1_score(preds2, trues2, NUM_CLASSES2, tile_n=512, num_splits=2))
    ref2 = _f1_score_ref(preds2, trues2, NUM_CLASSES2)
    assert jnp.allclose(out2, ref2, atol=1e-5, rtol=1e-5), (out2, ref2)

    print("KERNEL_OK")
</pallas_src>

<mosaic_0001>
module attributes {stable_mosaic.version = 11 : i64} {
  func.func @_f1_counts_kernel(%arg0: i32, %arg1: i32, %arg2: memref<1x1024xi32, #tpu.memory_space<vmem>>, %arg3: memref<1x1024xi32, #tpu.memory_space<vmem>>, %arg4: memref<1x8x3xi32, #tpu.memory_space<vmem>>) attributes {dimension_semantics = [#tpu.dimension_semantics<parallel>, #tpu.dimension_semantics<arbitrary>], iteration_bounds = array<i64: 1, 1>, scalar_prefetch = 0 : i64, scratch_operands = 0 : i64, tpu.core_type = #tpu.core_type<tc>, window_params = [{transform_indices = @transform_0, window_bounds = array<i64: 1, 1024>}, {transform_indices = @transform_1, window_bounds = array<i64: 1, 1024>}, {transform_indices = @transform_2, window_bounds = array<i64: 1, 8, 3>}]} {
    %c0_i32 = arith.constant 0 : i32
    %0 = arith.cmpi eq, %arg1, %c0_i32 : i32
    %1 = arith.extui %0 : i1 to i32
    %c0_i32_0 = arith.constant 0 : i32
    %2 = arith.cmpi ne, %1, %c0_i32_0 : i32
    scf.if %2 {
      %c0_i32_4 = arith.constant 0 : i32
      %14 = vector.broadcast %c0_i32_4 : i32 to vector<8x3xi32>
      %c0 = arith.constant 0 : index
      %c0_5 = arith.constant 0 : index
      %c0_6 = arith.constant 0 : index
      %15 = vector.load %arg4[%c0, %c0_5, %c0_6] : memref<1x8x3xi32, #tpu.memory_space<vmem>>, vector<1x8x3xi32>
      %16 = vector.shape_cast %15 : vector<1x8x3xi32> to vector<8x3xi32>
      %17 = vector.shape_cast %14 : vector<8x3xi32> to vector<1x8x3xi32>
      tpu.vector_store %arg4[%c0, %c0_5, %c0_6], %17 {strides = array<i32>} : memref<1x8x3xi32, #tpu.memory_space<vmem>>, vector<1x8x3xi32>,
    } else {
    }
    %3 = tpu.iota {dimensions = array<i32: 0>} : vector<8x1xi32>
    %c1_i32 = arith.constant 1 : i32
    %4 = arith.muli %arg0, %c1_i32 : i32
    %5 = arith.addi %4, %arg1 : i32
    %c1024_i32 = arith.constant 1024 : i32
    %6 = arith.muli %5, %c1024_i32 : i32
    %c1024_i32_1 = arith.constant 1024 : i32
    %7 = arith.addi %6, %c1024_i32_1 : i32
    %c1000_i32 = arith.constant 1000 : i32
    %8 = arith.cmpi sle, %7, %c1000_i32 : i32
    %9 = arith.extui %8 : i1 to i32
    %c0_i32_2 = arith.constant 0 : i32
    %10 = arith.cmpi ne, %9, %c0_i32_2 : i32
    scf.if %10 {
      %c0 = arith.constant 0 : index
      %c0_4 = arith.constant 0 : index
      %14 = vector.load %arg2[%c0, %c0_4] : memref<1x1024xi32, #tpu.memory_space<vmem>>, vector<1x1024xi32>
      %c0_5 = arith.constant 0 : index
      %c0_6 = arith.constant 0 : index
      %15 = vector.load %arg3[%c0_5, %c0_6] : memref<1x1024xi32, #tpu.memory_space<vmem>>, vector<1x1024xi32>
      %16 = vector.broadcast %14 : vector<1x1024xi32> to vector<8x1024xi32>
      %17 = vector.broadcast %3 : vector<8x1xi32> to vector<8x1024xi32>
      %18 = arith.cmpi eq, %16, %17 : vector<8x1024xi32>
      %19 = vector.broadcast %15 : vector<1x1024xi32> to vector<8x1024xi32>
      %20 = vector.broadcast %3 : vector<8x1xi32> to vector<8x1024xi32>
      %21 = arith.cmpi eq, %19, %20 : vector<8x1024xi32>
      %22 = arith.extui %18 : vector<8x1024xi1> to vector<8x1024xi32>
      %23 = arith.extui %21 : vector<8x1024xi1> to vector<8x1024xi32>
      %24 = arith.muli %22, %23 : vector<8x1024xi32>
      %cst = arith.constant dense<0> : vector<8xi32>
      %25 = vector.multi_reduction <add>, %24, %cst [1] : vector<8x1024xi32> to vector<8xi32>
      %26 = vector.shape_cast %25 : vector<8xi32> to vector<8x1xi32>
      %cst_7 = arith.constant dense<0> : vector<8xi32>
      %27 = vector.multi_reduction <add>, %23, %cst_7 [1] : vector<8x1024xi32> to vector<8xi32>
      %28 = vector.shape_cast %27 : vector<8xi32> to vector<8x1xi32>
      %cst_8 = arith.constant dense<0> : vector<8xi32>
      %29 = vector.multi_reduction <add>, %22, %cst_8 [1] : vector<8x1024xi32> to vector<8xi32>
      %30 = vector.shape_cast %29 : vector<8xi32> to vector<8x1xi32>
      %c0_9 = arith.constant 0 : index
      %c0_10 = arith.constant 0 : index
      %c0_11 = arith.constant 0 : index
      %31 = vector.load %arg4[%c0_9, %c0_10, %c0_11] : memref<1x8x3xi32, #tpu.memory_space<vmem>>, vector<1x8x3xi32>
      %32 = vector.shape_cast %31 : vector<1x8x3xi32> to vector<8x3xi32>
      %33 = tpu.concatenate %26, %28, %30 in 1 : vector<8x1xi32>, vector<8x1xi32>, vector<8x1xi32> -> vector<8x3xi32>
      %34 = arith.addi %32, %33 : vector<8x3xi32>
      %c0_12 = arith.constant 0 : index
      %c0_13 = arith.constant 0 : index
      %c0_14 = arith.constant 0 : index
      %35 = vector.load %arg4[%c0_12, %c0_13, %c0_14] : memref<1x8x3xi32, #tpu.memory_space<vmem>>, vector<1x8x3xi32>
      %36 = vector.shape_cast %35 : vector<1x8x3xi32> to vector<8x3xi32>
      %37 = vector.shape_cast %34 : vector<8x3xi32> to vector<1x8x3xi32>
      tpu.vector_store %arg4[%c0_12, %c0_13, %c0_14], %37 {strides = array<i32>} : memref<1x8x3xi32, #tpu.memory_space<vmem>>, vector<1x8x3xi32>,
    } else {
    }
    %true = arith.constant true
    %11 = arith.xori %8, %true : i1
    %12 = arith.extui %11 : i1 to i32
    %c0_i32_3 = arith.constant 0 : i32
    %13 = arith.cmpi ne, %12, %c0_i32_3 : i32
    scf.if %13 {
      %c0 = arith.constant 0 : index
      %c0_4 = arith.constant 0 : index
      %14 = vector.load %arg2[%c0, %c0_4] : memref<1x1024xi32, #tpu.memory_space<vmem>>, vector<1x1024xi32>
      %c0_5 = arith.constant 0 : index
      %c0_6 = arith.constant 0 : index
      %15 = vector.load %arg3[%c0_5, %c0_6] : memref<1x1024xi32, #tpu.memory_space<vmem>>, vector<1x1024xi32>
      %16 = vector.broadcast %14 : vector<1x1024xi32> to vector<8x1024xi32>
      %17 = vector.broadcast %3 : vector<8x1xi32> to vector<8x1024xi32>
      %18 = arith.cmpi eq, %16, %17 : vector<8x1024xi32>
      %19 = vector.broadcast %15 : vector<1x1024xi32> to vector<8x1024xi32>
      %20 = vector.broadcast %3 : vector<8x1xi32> to vector<8x1024xi32>
      %21 = arith.cmpi eq, %19, %20 : vector<8x1024xi32>
      %c1_i32_7 = arith.constant 1 : i32
      %22 = arith.muli %arg0, %c1_i32_7 : i32
      %23 = arith.addi %22, %arg1 : i32
      %c1024_i32_8 = arith.constant 1024 : i32
      %24 = arith.muli %23, %c1024_i32_8 : i32
      %25 = tpu.iota {dimensions = array<i32: 1>} : vector<1x1024xi32>
      %26 = vector.broadcast %24 : i32 to vector<1x1024xi32>
      %27 = arith.addi %26, %25 : vector<1x1024xi32>
      %c1000_i32_9 = arith.constant 1000 : i32
      %28 = vector.broadcast %c1000_i32_9 : i32 to vector<1x1024xi32>
      %29 = arith.cmpi slt, %27, %28 : vector<1x1024xi32>
      %30 = vector.broadcast %29 : vector<1x1024xi1> to vector<8x1024xi1>
      %31 = arith.andi %18, %30 : vector<8x1024xi1>
      %32 = vector.broadcast %29 : vector<1x1024xi1> to vector<8x1024xi1>
      %33 = arith.andi %21, %32 : vector<8x1024xi1>
      %34 = arith.extui %31 : vector<8x1024xi1> to vector<8x1024xi32>
      %35 = arith.extui %33 : vector<8x1024xi1> to vector<8x1024xi32>
      %36 = arith.muli %34, %35 : vector<8x1024xi32>
      %cst = arith.constant dense<0> : vector<8xi32>
      %37 = vector.multi_reduction <add>, %36, %cst [1] : vector<8x1024xi32> to vector<8xi32>
      %38 = vector.shape_cast %37 : vector<8xi32> to vector<8x1xi32>
      %cst_10 = arith.constant dense<0> : vector<8xi32>
      %39 = vector.multi_reduction <add>, %35, %cst_10 [1] : vector<8x1024xi32> to vector<8xi32>
      %40 = vector.shape_cast %39 : vector<8xi32> to vector<8x1xi32>
      %cst_11 = arith.constant dense<0> : vector<8xi32>
      %41 = vector.multi_reduction <add>, %34, %cst_11 [1] : vector<8x1024xi32> to vector<8xi32>
      %42 = vector.shape_cast %41 : vector<8xi32> to vector<8x1xi32>
      %c0_12 = arith.constant 0 : index
      %c0_13 = arith.constant 0 : index
      %c0_14 = arith.constant 0 : index
      %43 = vector.load %arg4[%c0_12, %c0_13, %c0_14] : memref<1x8x3xi32, #tpu.memory_space<vmem>>, vector<1x8x3xi32>
      %44 = vector.shape_cast %43 : vector<1x8x3xi32> to vector<8x3xi32>
      %45 = tpu.concatenate %38, %40, %42 in 1 : vector<8x1xi32>, vector<8x1xi32>, vector<8x1xi32> -> vector<8x3xi32>
      %46 = arith.addi %44, %45 : vector<8x3xi32>
      %c0_15 = arith.constant 0 : index
      %c0_16 = arith.constant 0 : index
      %c0_17 = arith.constant 0 : index
      %47 = vector.load %arg4[%c0_15, %c0_16, %c0_17] : memref<1x8x3xi32, #tpu.memory_space<vmem>>, vector<1x8x3xi32>
      %48 = vector.shape_cast %47 : vector<1x8x3xi32> to vector<8x3xi32>
      %49 = vector.shape_cast %46 : vector<8x3xi32> to vector<1x8x3xi32>
      tpu.vector_store %arg4[%c0_15, %c0_16, %c0_17], %49 {strides = array<i32>} : memref<1x8x3xi32, #tpu.memory_space<vmem>>, vector<1x8x3xi32>,
    } else {
    }
    return
  }
  func.func @transform_0(%arg0: i32, %arg1: i32) -> (i32, i32) {
    %c1_i32 = arith.constant 1 : i32
    %0 = arith.muli %arg0, %c1_i32 : i32
    %1 = arith.addi %0, %arg1 : i32
    %c0_i32 = arith.constant 0 : i32
    %2 = arith.minsi %1, %c0_i32 : i32
    %c0_i32_0 = arith.constant 0 : i32
    %c0_i32_1 = arith.constant 0 : i32
    return %c0_i32_0, %2 : i32, i32
  }
  func.func @transform_1(%arg0: i32, %arg1: i32) -> (i32, i32) {
    %c1_i32 = arith.constant 1 : i32
    %0 = arith.muli %arg0, %c1_i32 : i32
    %1 = arith.addi %0, %arg1 : i32
    %c0_i32 = arith.constant 0 : i32
    %2 = arith.minsi %1, %c0_i32 : i32
    %c0_i32_0 = arith.constant 0 : i32
    %c0_i32_1 = arith.constant 0 : i32
    return %c0_i32_0, %2 : i32, i32
  }
  func.func @transform_2(%arg0: i32, %arg1: i32) -> (i32, i32, i32) {
    %c0_i32 = arith.constant 0 : i32
    %c0_i32_0 = arith.constant 0 : i32
    %c0_i32_1 = arith.constant 0 : i32
    return %arg0, %c0_i32, %c0_i32_0 : i32, i32, i32
  }
}

</mosaic_0001>

<llo_original>
// kernel: tpu_custom_call.1
$region0: #{tpu_custom_call.1}
  #allocation0 [shape = 'u32[]', space=smem, size = 0x4, offset = 0x4, fixed_abs, tag = 'smem constant byte address 0x4 - core index']
  #allocation1 [shape = 'u32[72,128]{1,0:T(1,128)}', space=vmem, size = 0x9000, scoped, tag = 'internal scratch']
  %s0 = inlined_call_operand.hbm [shape: s32[1,1000], index: 0, kind: input, shape index: {}]
  %s1 = inlined_call_operand.hbm [shape: s32[1,1000], index: 1, kind: input, shape index: {}]
  %s2 = inlined_call_operand.vmem [shape: s32[1,8,3], index: 2, kind: output, shape index: {}]
  %s3 = sld [smem:[#allocation0]]
  $region38: #{tpu_custom_call.1} parent=0
    _
  %s5 = ssub.s32 1, %s3
  %s6 = scalar_select 0, %s5, %s3
  $region1: #{tpu_custom_call.1} parent=0
    #allocation2 [shape = 'u8[4096]{0}', space=vmem, size = 0x1000, scoped, tag = 'input window, operand 0, single buffered']
    #allocation3 [shape = 's32[1]{0}', space=sflag, size = 0x4, scoped, tag = 'scoped memory for tpu_custom_call.1']
    #allocation4 [shape = 'u8[4096]{0}', space=vmem, size = 0x1000, scoped, tag = 'input window, operand 1, single buffered']
    #allocation5 [shape = 's32[1]{0}', space=sflag, size = 0x4, scoped, tag = 'scoped memory for tpu_custom_call.1']
    %7 = vsyncpa [#allocation3], 0
    %8 = vsyncpa [#allocation5], 0
    // Predicated region
    $region2: #{tpu_custom_call.1} parent=1 // pred_check
      _
    $region3: #{tpu_custom_call.1} parent=1 // pred_check_branch
      %10 = sbr.rel (0) target = $region5
    $region4: #{tpu_custom_call.1} parent=1 // pred_region
      %s11 = sadd.s32 0, 0
      %p12 = scmp.lt.s32.totalorder %s11, 0
      %s13 = scalar_select %p12, %s11, 0
      %s14 = smul.u32 8, %s13
      %16 = vsyncadd [#allocation3], 0
      %s17 = scalar_lea.hbm %s0, %s14
      %s19 = sshll.u32 %s17, 4
      %s20 = int_to_ptr.hbm [resolvable:$true] %s19
      %s21 = sshll.u32 [#allocation2], 4
      %s22 = int_to_ptr.vmem [resolvable:$true] %s21
      %24 = dma.hbm_to_vmem [thread:$0]  %s20, 128, %s22, [#allocation3]
    $region5: #{tpu_custom_call.1} parent=1 // pred_fallthru
      _
    // Predicated region
    $region6: #{tpu_custom_call.1} parent=1 // pred_check
      _
    $region7: #{tpu_custom_call.1} parent=1 // pred_check_branch
      %26 = sbr.rel (0) target = $region9
    $region8: #{tpu_custom_call.1} parent=1 // pred_region
      %s27 = sadd.s32 0, 0
      %p28 = scmp.lt.s32.totalorder %s27, 0
      %s29 = scalar_select %p28, %s27, 0
      %s30 = smul.u32 8, %s29
      %32 = vsyncadd [#allocation5], 0
      %s33 = scalar_lea.hbm %s1, %s30
      %s35 = sshll.u32 %s33, 4
      %s36 = int_to_ptr.hbm [resolvable:$true] %s35
      %s37 = sshll.u32 [#allocation4], 4
      %s38 = int_to_ptr.vmem [resolvable:$true] %s37
      %40 = dma.hbm_to_vmem [thread:$0]  %s36, 128, %s38, [#allocation5]
    $region9: #{tpu_custom_call.1} parent=1 // pred_fallthru
      _
    // Predicated region
    $region10: #{tpu_custom_call.1} parent=1 // pred_check
      _
    $region11: #{tpu_custom_call.1} parent=1 // pred_check_branch
      %42 = sbr.rel (0) target = $region13
    $region12: #{tpu_custom_call.1} parent=1 // pred_region
      %44 = dma.done [#allocation3], 128
    $region13: #{tpu_custom_call.1} parent=1 // pred_fallthru
      _
    // Predicated region
    $region14: #{tpu_custom_call.1} parent=1 // pred_check
      _
    $region15: #{tpu_custom_call.1} parent=1 // pred_check_branch
      %46 = sbr.rel (0) target = $region17
    $region16: #{tpu_custom_call.1} parent=1 // pred_region
      %48 = dma.done [#allocation5], 128
    $region17: #{tpu_custom_call.1} parent=1 // pred_fallthru
      _
    %s49 = sadd.s32 0, 0
    %p50 = scmp.lt.s32.totalorder %s49, 0
    %s51 = scalar_select %p50, %s49, 0
    %s52 = smul.u32 8, %s51
    %s53 = sadd.s32 0, 0
    %p54 = scmp.lt.s32.totalorder %s53, 0
    %s55 = scalar_select %p54, %s53, 0
    %s56 = smul.u32 8, %s55
    %p57 = scmp.eq.s32.totalorder 0, 0
    // Predicated region
    $region18: #{tpu_custom_call.1} parent=1 // pred_check
      %p58 = pneg %p57
    $region19: #{tpu_custom_call.1} parent=1 // pred_check_branch
      %60 = sbr.rel (%p58) target = $region21
    $region20: #{tpu_custom_call.1} parent=1 // pred_region
      %vm61 = vcmask 23552
      %62 = vst.msk [vmem:[%s2] sm:$0xff] %vm61, 0
    $region21: #{tpu_custom_call.1} parent=1 // pred_fallthru
      _
    %v63 = vlaneseq
    %v64 = vshrl.u32 %v63, 7
    %s65 = sadd.s32 0, 0
    %s66 = smul.u32 %s65, 1024
    %s67 = sadd.s32 %s66, 1024
    %p68 = scmp.le.s32.totalorder %s67, 1000
    // Predicated region
    $region22: #{tpu_custom_call.1} parent=1 // pred_check
      %p69 = pneg %p68
    $region23: #{tpu_custom_call.1} parent=1 // pred_check_branch
      %71 = sbr.rel (%p69) target = $region25
    $region24: #{tpu_custom_call.1} parent=1 // pred_region
      %v72 = vld [vmem:[#allocation2] sm:$0xff]
      %v73 = vld [vmem:[#allocation4] sm:$0xff]
      %v74 = vperm.slane %v72, 0
      %v75 = vperm.slane %v72, 1
      %v76 = vperm.slane %v72, 2
      %v77 = vperm.slane %v72, 3
      %v78 = vperm.slane %v72, 4
      %v79 = vperm.slane %v72, 5
      %v80 = vperm.slane %v72, 6
      %v81 = vperm.slane %v72, 7
      %vm82 = vcmp.eq.s32.totalorder %v74, %v64
      %vm83 = vcmp.eq.s32.totalorder %v75, %v64
      %vm84 = vcmp.eq.s32.totalorder %v76, %v64
      %vm85 = vcmp.eq.s32.totalorder %v77, %v64
      %vm86 = vcmp.eq.s32.totalorder %v78, %v64
      %vm87 = vcmp.eq.s32.totalorder %v79, %v64
      %vm88 = vcmp.eq.s32.totalorder %v80, %v64
      %vm89 = vcmp.eq.s32.totalorder %v81, %v64
      %v90 = vperm.slane %v73, 0
      %v91 = vperm.slane %v73, 1
      %v92 = vperm.slane %v73, 2
      %v93 = vperm.slane %v73, 3
      %v94 = vperm.slane %v73, 4
      %v95 = vperm.slane %v73, 5
      %v96 = vperm.slane %v73, 6
      %v97 = vperm.slane %v73, 7
      %vm98 = vcmp.eq.s32.totalorder %v90, %v64
      %vm99 = vcmp.eq.s32.totalorder %v91, %v64
      %vm100 = vcmp.eq.s32.totalorder %v92, %v64
      %vm101 = vcmp.eq.s32.totalorder %v93, %v64
      %vm102 = vcmp.eq.s32.totalorder %v94, %v64
      %vm103 = vcmp.eq.s32.totalorder %v95, %v64
      %vm104 = vcmp.eq.s32.totalorder %v96, %v64
      %vm105 = vcmp.eq.s32.totalorder %v97, %v64
      %v106 = vsel %vm82, 1, 0
      %v107 = vsel %vm83, 1, 0
      %v108 = vsel %vm84, 1, 0
      %v109 = vsel %vm85, 1, 0
      %v110 = vsel %vm86, 1, 0
      %v111 = vsel %vm87, 1, 0
      %v112 = vsel %vm88, 1, 0
      %v113 = vsel %vm89, 1, 0
      %v114 = vsel %vm98, 1, 0
      %v115 = vsel %vm99, 1, 0
      %v116 = vsel %vm100, 1, 0
      %v117 = vsel %vm101, 1, 0
      %v118 = vsel %vm102, 1, 0
      %v119 = vsel %vm103, 1, 0
      %v120 = vsel %vm104, 1, 0
      %v121 = vsel %vm105, 1, 0
      %v122 = vmul.u32 %v106, %v114
      %v123 = vmul.u32 %v107, %v115
      %v124 = vmul.u32 %v108, %v116
      %v125 = vmul.u32 %v109, %v117
      %v126 = vmul.u32 %v110, %v118
      %v127 = vmul.u32 %v111, %v119
      %v128 = vmul.u32 %v112, %v120
      %v129 = vmul.u32 %v113, %v121
      %v130 = vadd.s32 %v122, %v126
      %v131 = vadd.s32 %v123, %v127
      %v132 = vadd.s32 %v124, %v128
      %v133 = vadd.s32 %v125, %v129
      %v134 = vadd.s32 %v130, %v131
      %v135 = vadd.s32 %v132, %v133
      %v136 = vadd.s32 %v134, %v135
      %v137 = vand.u32 %v136, 65535
      %v138 = vshrl.u32 %v136, 16
      %v139 = vcvt.s32.f32 %v137
      %v140 = vcvt.s32.f32 %v138
      %141 = vadd.xlane.f32.xlu0 %v139
      %v142 = vpop.xlane.xlu0 %141
      %143 = vadd.xlane.f32.xlu0 %v140
      %v144 = vpop.xlane.xlu0 %143
      %v145 = vcvt.f32.s32 %v142
      %v146 = vcvt.f32.s32 %v144
      %v147 = vshll.u32 %v146, 16
      %v148 = vadd.s32 %v147, %v145
      %v149 = vadd.s32 %v114, %v118
      %v150 = vadd.s32 %v115, %v119
      %v151 = vadd.s32 %v116, %v120
      %v152 = vadd.s32 %v117, %v121
      %v153 = vadd.s32 %v149, %v150
      %v154 = vadd.s32 %v151, %v152
      %v155 = vadd.s32 %v153, %v154
      %v156 = vand.u32 %v155, 65535
      %v157 = vshrl.u32 %v155, 16
      %v158 = vcvt.s32.f32 %v156
      %v159 = vcvt.s32.f32 %v157
      %160 = vadd.xlane.f32.xlu0 %v158
      %v161 = vpop.xlane.xlu0 %160
      %162 = vadd.xlane.f32.xlu0 %v159
      %v163 = vpop.xlane.xlu0 %162
      %v164 = vcvt.f32.s32 %v161
      %v165 = vcvt.f32.s32 %v163
      %v166 = vshll.u32 %v165, 16
      %v167 = vadd.s32 %v166, %v164
      %v168 = vadd.s32 %v106, %v110
      %v169 = vadd.s32 %v107, %v111
      %v170 = vadd.s32 %v108, %v112
      %v171 = vadd.s32 %v109, %v113
      %v172 = vadd.s32 %v168, %v169
      %v173 = vadd.s32 %v170, %v171
      %v174 = vadd.s32 %v172, %v173
      %v175 = vand.u32 %v174, 65535
      %v176 = vshrl.u32 %v174, 16
      %v177 = vcvt.s32.f32 %v175
      %v178 = vcvt.s32.f32 %v176
      %179 = vadd.xlane.f32.xlu0 %v177
      %v180 = vpop.xlane.xlu0 %179
      %181 = vadd.xlane.f32.xlu0 %v178
      %v182 = vpop.xlane.xlu0 %181
      %v183 = vcvt.f32.s32 %v180
      %v184 = vcvt.f32.s32 %v182
      %v185 = vshll.u32 %v184, 16
      %v186 = vadd.s32 %v185, %v183
      %v187 = vld [vmem:[%s2] sm:$0xff]
      %vm188 = vcmask 7168
      %v189 = vsel %vm188, %v148, %v167
      %vm190 = vcmask 15360
      %v191 = vsel %vm190, %v189, %v186
      %v192 = vadd.s32 %v187, %v191
      %vm193 = vcmask 23552
      %194 = vst.msk [vmem:[%s2] sm:$0xff] %vm193, %v192
    $region25: #{tpu_custom_call.1} parent=1 // pred_fallthru
      _
    %p195 = scmp.gt.s32.totalorder %s67, 1000
    // Predicated region
    $region26: #{tpu_custom_call.1} parent=1 // pred_check
      %p196 = pneg %p195
    $region27: #{tpu_custom_call.1} parent=1 // pred_check_branch
      %198 = sbr.rel (%p196) target = $region29
    $region28: #{tpu_custom_call.1} parent=1 // pred_region
      %v199 = vld [vmem:[#allocation2] sm:$0xff]
      %v200 = vld [vmem:[#allocation4] sm:$0xff]
      %v201 = vperm.slane %v199, 0
      %v202 = vperm.slane %v199, 1
      %v203 = vperm.slane %v199, 2
      %v204 = vperm.slane %v199, 3
      %v205 = vperm.slane %v199, 4
      %v206 = vperm.slane %v199, 5
      %v207 = vperm.slane %v199, 6
      %v208 = vperm.slane %v199, 7
      %vm209 = vcmp.eq.s32.totalorder %v201, %v64
      %vm210 = vcmp.eq.s32.totalorder %v202, %v64
      %vm211 = vcmp.eq.s32.totalorder %v203, %v64
      %vm212 = vcmp.eq.s32.totalorder %v204, %v64
      %vm213 = vcmp.eq.s32.totalorder %v205, %v64
      %vm214 = vcmp.eq.s32.totalorder %v206, %v64
      %vm215 = vcmp.eq.s32.totalorder %v207, %v64
      %vm216 = vcmp.eq.s32.totalorder %v208, %v64
      %v217 = vperm.slane %v200, 0
      %v218 = vperm.slane %v200, 1
      %v219 = vperm.slane %v200, 2
      %v220 = vperm.slane %v200, 3
      %v221 = vperm.slane %v200, 4
      %v222 = vperm.slane %v200, 5
      %v223 = vperm.slane %v200, 6
      %v224 = vperm.slane %v200, 7
      %vm225 = vcmp.eq.s32.totalorder %v217, %v64
      %vm226 = vcmp.eq.s32.totalorder %v218, %v64
      %vm227 = vcmp.eq.s32.totalorder %v219, %v64
      %vm228 = vcmp.eq.s32.totalorder %v220, %v64
      %vm229 = vcmp.eq.s32.totalorder %v221, %v64
      %vm230 = vcmp.eq.s32.totalorder %v222, %v64
      %vm231 = vcmp.eq.s32.totalorder %v223, %v64
      %vm232 = vcmp.eq.s32.totalorder %v224, %v64
      %v233 = vlaneseq
      %v234 = vand.u32 %v233, 127
      %v235 = vadd.s32 %v234, 128
      %v236 = vadd.s32 %v234, 256
      %v237 = vadd.s32 %v234, 384
      %v238 = vadd.s32 %v234, 512
      %v239 = vadd.s32 %v234, 640
      %v240 = vadd.s32 %v234, 768
      %v241 = vadd.s32 %v234, 896
      %v242 = vstv %s66
      %v243 = vadd.s32 %v242, %v234
      %v244 = vadd.s32 %v242, %v235
      %v245 = vadd.s32 %v242, %v236
      %v246 = vadd.s32 %v242, %v237
      %v247 = vadd.s32 %v242, %v238
      %v248 = vadd.s32 %v242, %v239
      %v249 = vadd.s32 %v242, %v240
      %v250 = vadd.s32 %v242, %v241
      %vm251 = vcmp.lt.s32.totalorder %v243, 1000
      %vm252 = vcmp.lt.s32.totalorder %v244, 1000
      %vm253 = vcmp.lt.s32.totalorder %v245, 1000
      %vm254 = vcmp.lt.s32.totalorder %v246, 1000
      %vm255 = vcmp.lt.s32.totalorder %v247, 1000
      %vm256 = vcmp.lt.s32.totalorder %v248, 1000
      %vm257 = vcmp.lt.s32.totalorder %v249, 1000
      %vm258 = vcmp.lt.s32.totalorder %v250, 1000
      %v259 = vsel %vm251, 1, 0
      %v260 = vsel %vm252, 1, 0
      %v261 = vsel %vm253, 1, 0
      %v262 = vsel %vm254, 1, 0
      %v263 = vsel %vm255, 1, 0
      %v264 = vsel %vm256, 1, 0
      %v265 = vsel %vm257, 1, 0
      %v266 = vsel %vm258, 1, 0
      %vm267 = vcmp.eq.s32.totalorder %v259, 1
      %vm268 = vcmp.eq.s32.totalorder %v260, 1
      %vm269 = vcmp.eq.s32.totalorder %v261, 1
      %vm270 = vcmp.eq.s32.totalorder %v262, 1
      %vm271 = vcmp.eq.s32.totalorder %v263, 1
      %vm272 = vcmp.eq.s32.totalorder %v264, 1
      %vm273 = vcmp.eq.s32.totalorder %v265, 1
      %vm274 = vcmp.eq.s32.totalorder %v266, 1
      %vm275 = vmand %vm209, %vm267
      %vm276 = vmand %vm210, %vm268
      %vm277 = vmand %vm211, %vm269
      %vm278 = vmand %vm212, %vm270
      %vm279 = vmand %vm213, %vm271
      %vm280 = vmand %vm214, %vm272
      %vm281 = vmand %vm215, %vm273
      %vm282 = vmand %vm216, %vm274
      %vm283 = vmand %vm225, %vm267
      %vm284 = vmand %vm226, %vm268
      %vm285 = vmand %vm227, %vm269
      %vm286 = vmand %vm228, %vm270
      %vm287 = vmand %vm229, %vm271
      %vm288 = vmand %vm230, %vm272
      %vm289 = vmand %vm231, %vm273
      %vm290 = vmand %vm232, %vm274
      %v291 = vsel %vm275, 1, 0
      %v292 = vsel %vm276, 1, 0
      %v293 = vsel %vm277, 1, 0
      %v294 = vsel %vm278, 1, 0
      %v295 = vsel %vm279, 1, 0
      %v296 = vsel %vm280, 1, 0
      %v297 = vsel %vm281, 1, 0
      %v298 = vsel %vm282, 1, 0
      %v299 = vsel %vm283, 1, 0
      %v300 = vsel %vm284, 1, 0
      %v301 = vsel %vm285, 1, 0
      %v302 = vsel %vm286, 1, 0
      %v303 = vsel %vm287, 1, 0
      %v304 = vsel %vm288, 1, 0
      %v305 = vsel %vm289, 1, 0
      %v306 = vsel %vm290, 1, 0
      %v307 = vmul.u32 %v291, %v299
      %v308 = vmul.u32 %v292, %v300
      %v309 = vmul.u32 %v293, %v301
      %v310 = vmul.u32 %v294, %v302
      %v311 = vmul.u32 %v295, %v303
      %v312 = vmul.u32 %v296, %v304
      %v313 = vmul.u32 %v297, %v305
      %v314 = vmul.u32 %v298, %v306
      %v315 = vadd.s32 %v307, %v311
      %v316 = vadd.s32 %v308, %v312
      %v317 = vadd.s32 %v309, %v313
      %v318 = vadd.s32 %v310, %v314
      %v319 = vadd.s32 %v315, %v316
      %v320 = vadd.s32 %v317, %v318
      %v321 = vadd.s32 %v319, %v320
      %v322 = vand.u32 %v321, 65535
      %v323 = vshrl.u32 %v321, 16
      %v324 = vcvt.s32.f32 %v322
      %v325 = vcvt.s32.f32 %v323
      %326 = vadd.xlane.f32.xlu0 %v324
      %v327 = vpop.xlane.xlu0 %326
      %328 = vadd.xlane.f32.xlu0 %v325
      %v329 = vpop.xlane.xlu0 %328
      %v330 = vcvt.f32.s32 %v327
      %v331 = vcvt.f32.s32 %v329
      %v332 = vshll.u32 %v331, 16
      %v333 = vadd.s32 %v332, %v330
      %v334 = vadd.s32 %v299, %v303
      %v335 = vadd.s32 %v300, %v304
      %v336 = vadd.s32 %v301, %v305
      %v337 = vadd.s32 %v302, %v306
      %v338 = vadd.s32 %v334, %v335
      %v339 = vadd.s32 %v336, %v337
      %v340 = vadd.s32 %v338, %v339
      %v341 = vand.u32 %v340, 65535
      %v342 = vshrl.u32 %v340, 16
      %v343 = vcvt.s32.f32 %v341
      %v344 = vcvt.s32.f32 %v342
      %345 = vadd.xlane.f32.xlu0 %v343
      %v346 = vpop.xlane.xlu0 %345
      %347 = vadd.xlane.f32.xlu0 %v344
      %v348 = vpop.xlane.xlu0 %347
      %v349 = vcvt.f32.s32 %v346
      %v350 = vcvt.f32.s32 %v348
      %v351 = vshll.u32 %v350, 16
      %v352 = vadd.s32 %v351, %v349
      %v353 = vadd.s32 %v291, %v295
      %v354 = vadd.s32 %v292, %v296
      %v355 = vadd.s32 %v293, %v297
      %v356 = vadd.s32 %v294, %v298
      %v357 = vadd.s32 %v353, %v354
      %v358 = vadd.s32 %v355, %v356
      %v359 = vadd.s32 %v357, %v358
      %v360 = vand.u32 %v359, 65535
      %v361 = vshrl.u32 %v359, 16
      %v362 = vcvt.s32.f32 %v360
      %v363 = vcvt.s32.f32 %v361
      %364 = vadd.xlane.f32.xlu0 %v362
      %v365 = vpop.xlane.xlu0 %364
      %366 = vadd.xlane.f32.xlu0 %v363
      %v367 = vpop.xlane.xlu0 %366
      %v368 = vcvt.f32.s32 %v365
      %v369 = vcvt.f32.s32 %v367
      %v370 = vshll.u32 %v369, 16
      %v371 = vadd.s32 %v370, %v368
      %v372 = vld [vmem:[%s2] sm:$0xff]
      %vm373 = vcmask 7168
      %v374 = vsel %vm373, %v333, %v352
      %vm375 = vcmask 15360
      %v376 = vsel %vm375, %v374, %v371
      %v377 = vadd.s32 %v372, %v376
      %vm378 = vcmask 23552
      %379 = vst.msk [vmem:[%s2] sm:$0xff] %vm378, %v377
    $region29: #{tpu_custom_call.1} parent=1 // pred_fallthru
      _
    // Predicated region
    $region30: #{tpu_custom_call.1} parent=1 // pred_check
      _
    $region31: #{tpu_custom_call.1} parent=1 // pred_check_branch
      %381 = sbr.rel (0) target = $region33
    $region32: #{tpu_custom_call.1} parent=1 // pred_region
      _
    $region33: #{tpu_custom_call.1} parent=1 // pred_fallthru
      _
    // Predicated region
    $region34: #{tpu_custom_call.1} parent=1 // pred_check
      _
    $region35: #{tpu_custom_call.1} parent=1 // pred_check_branch
      %383 = sbr.rel (0) target = $region37
    $region36: #{tpu_custom_call.1} parent=1 // pred_region
      _
    $region37: #{tpu_custom_call.1} parent=1 // pred_fallthru
      _
    %384 = vsyncpa [#allocation3], 1
    %385 = vsyncpa [#allocation5], 1

</llo_original>
